<compile_context>
chip_gen: v7x
topology: tpu7x:2x2x1
jax: 0.10.0
libtpu: 0.0.40
codegen_flags: <defaults>
</compile_context>

<pallas_src>
import functools
import math

import jax
import jax.numpy as jnp
from jax import lax
from jax.experimental import pallas as pl
from jax.experimental.pallas import tpu as pltpu


_VMEM_LIMIT = 48 * 1024 * 1024


def _pick_tile(dim, target, align):
    """Largest multiple of `align` <= target that divides dim, else full dim."""
    if dim <= target:
        return dim
    t = (target // align) * align
    while t >= align:
        if dim % t == 0:
            return t
        t -= align
    return dim


# ==================================================================
# Kernel A: fused QKV projection + per-token prep.
#   q = rotary(rms_norm_per_head(x @ Wq.T)) * (1/sqrt(hd))
#   k = rotary(rms_norm_per_head(x @ Wk.T))
#   v = lambda0 * (x @ Wv.T) + lambda1 * vi
# grid = (N/tn, M/tm, K/tk), k innermost (reduction); prep runs once per
# output tile in the finalize phase on the f32 accumulators.
# ==================================================================
def _qkv_prep_kernel(lam_ref, x_ref, wq_ref, wk_ref, wv_ref,
                     vi_ref, cos_ref, sin_ref, seg_ref, rot_ref,
                     q_out, k_out, v_out,
                     qacc, kacc, vacc, *, sm_scale):
    kk = pl.program_id(2)

    @pl.when(kk == 0)
    def _init():
        qacc[...] = jnp.zeros_like(qacc)
        kacc[...] = jnp.zeros_like(kacc)
        vacc[...] = jnp.zeros_like(vacc)

    x = x_ref[...]                                   # (tm, tk) read once
    dims = (((1,), (1,)), ((), ()))                  # contract the shared K axis
    qacc[...] += lax.dot_general(x, wq_ref[...], dims,
                                 preferred_element_type=jnp.float32)
    kacc[...] += lax.dot_general(x, wk_ref[...], dims,
                                 preferred_element_type=jnp.float32)
    vacc[...] += lax.dot_general(x, wv_ref[...], dims,
                                 preferred_element_type=jnp.float32)

    @pl.when(kk == pl.num_programs(2) - 1)
    def _finalize():
        eps = jnp.float32(jnp.finfo(jnp.float32).eps)   # F.rms_norm default eps
        cos = cos_ref[...]              # (tm, tn) f32
        sin = sin_ref[...]              # (tm, tn) f32, sign already folded
        seg = seg_ref[...]              # (tn, tn) block-diag 1/hd (per-head mean)
        rot = rot_ref[...]              # (tn, tn) rotate-half permutation
        rdims = (((1,), (0,)), ((), ()))

        def norm_rotate(acc_ref, extra_scale):
            a = acc_ref[...]                                         # f32
            # per-head mean of squares, broadcast across the head's lanes (MXU)
            ms = lax.dot_general(a * a, seg, rdims,
                                 preferred_element_type=jnp.float32)
            an = a * (lax.rsqrt(ms + eps) * extra_scale)
            # rotate-half within each head, lane-dense (MXU permutation)
            rolled = lax.dot_general(an, rot, rdims,
                                     preferred_element_type=jnp.float32)
            return an * cos + rolled * sin

        q_out[...] = norm_rotate(qacc, jnp.float32(sm_scale)).astype(q_out.dtype)
        k_out[...] = norm_rotate(kacc, jnp.float32(1.0)).astype(k_out.dtype)
        v_out[...] = (lam_ref[0] * vacc[...]
                      + lam_ref[1] * vi_ref[...].astype(jnp.float32)
                      ).astype(v_out.dtype)


def qkv_prep(x, wq, wk, wv, vi, cos_full, sin_full, lambdas, num_heads,
             sm_scale, *, tm_t=512, tn_t=256, tk_t=2048):
    M, K = x.shape
    N = wq.shape[0]
    hd = N // num_heads
    half = hd // 2

    tm = _pick_tile(M, tm_t, 8)
    tn = _pick_tile(N, tn_t, math.lcm(128, hd))      # head- and lane-aligned
    tk = _pick_tile(K, tk_t, 128)                    # prefers full-K contraction
    grid = (N // tn, M // tm, K // tk)               # N outermost: weights resident

    # Constant per-tile matrices (fetched once — constant block index):
    #   seg[a, b] = 1/hd if a, b are in the same head (per-head mean of squares)
    #   rot[a, p] = 1    if a is the rotate-half source lane of p
    lane = jnp.arange(tn, dtype=jnp.int32)
    seg = ((lane[:, None] // hd) == (lane[None, :] // hd)).astype(jnp.float32) / hd
    within = lane % hd
    src = jnp.where(within < half, lane + half, lane - half)
    rotm = (lane[:, None] == src[None, :]).astype(jnp.float32)

    x_spec = pl.BlockSpec((tm, tk), lambda j, i, k: (i, k))
    w_spec = pl.BlockSpec((tn, tk), lambda j, i, k: (j, k))
    tok_spec = pl.BlockSpec((tm, tn), lambda j, i, k: (i, j))   # no k dependence
    const_spec = pl.BlockSpec((tn, tn), lambda j, i, k: (0, 0))
    out_spec = pl.BlockSpec((tm, tn), lambda j, i, k: (i, j))
    lam_spec = pl.BlockSpec(memory_space=pltpu.MemorySpace.SMEM)

    q, k, v = pl.pallas_call(
        functools.partial(_qkv_prep_kernel, sm_scale=sm_scale),
        out_shape=tuple(jax.ShapeDtypeStruct((M, N), x.dtype) for _ in range(3)),
        grid=grid,
        in_specs=[lam_spec, x_spec, w_spec, w_spec, w_spec,
                  tok_spec, tok_spec, tok_spec, const_spec, const_spec],
        out_specs=tuple(out_spec for _ in range(3)),
        scratch_shapes=[pltpu.VMEM((tm, tn), jnp.float32)] * 3,
        compiler_params=pltpu.CompilerParams(
            dimension_semantics=("parallel", "parallel", "arbitrary"),
            vmem_limit_bytes=_VMEM_LIMIT),
    )(lambdas, x, wq, wk, wv, vi, cos_full, sin_full, seg, rotm)
    return q, k, v


# ==================================================================
# Kernel B: flash attention over the prepped q/k/v with a triangular schedule.
# 1-D grid over lower-triangular (q-block, kv-block) pairs; scalar-prefetched
# index arrays drive the BlockSpec index maps.
# ==================================================================
def _flash_attn_kernel(qidx_ref, kidx_ref, q_ref, k_ref, v_ref, o_ref,
                       m_sc, l_sc, acc_sc, *, num_heads, tq, tk):
    D = q_ref.shape[-1]
    hd = D // num_heads
    neg = jnp.float32(-1e30)

    step = pl.program_id(0)
    qi = qidx_ref[step]
    ki = kidx_ref[step]
    k_last = ((qi + 1) * tq - 1) // tk       # last kv block for this q block

    @pl.when(ki == 0)
    def _init():
        m_sc[...] = jnp.full_like(m_sc, neg)
        l_sc[...] = jnp.zeros_like(l_sc)
        acc_sc[...] = jnp.zeros_like(acc_sc)

    # Causal mask for this block pair (all-True for blocks strictly below the
    # diagonal, so the where() is a cheap no-op there).  The FIRST scheduled
    # block for every q block is ki == 0, where every row has col 0 unmasked,
    # so m becomes finite immediately and the -1e30 sentinel never produces a
    # spurious exp(0) contribution on later fully-masked rows (p underflows to 0).
    row = qi * tq + lax.broadcasted_iota(jnp.int32, (tq, tk), 0)
    col = ki * tk + lax.broadcasted_iota(jnp.int32, (tq, tk), 1)
    causal = row >= col

    # TODO(synk): for very large head counts switch to lax.fori_loop to bound
    #             live ranges; static unroll is fine for H <= ~16.
    for h in range(num_heads):
        sl = slice(h * hd, (h + 1) * hd)
        # q is already rms-normed, rotated and pre-scaled by 1/sqrt(hd).
        s = lax.dot_general(q_ref[:, sl], k_ref[:, sl], (((1,), (1,)), ((), ())),
                            preferred_element_type=jnp.float32)     # (tq, tk)
        s = jnp.where(causal, s, neg)

        m_prev = m_sc[h]                                   # (tq, 128) lane-broadcast
        m_new = jnp.maximum(m_prev, jnp.max(s, axis=-1, keepdims=True))
        alpha = jnp.exp(m_prev - m_new)
        # NOTE: exp kept in f32 (v5e has no bf16 EUP path); on v6e/v7x a bf16
        # exp here roughly doubles transcendental throughput if EUP binds.
        p = jnp.exp(s - m_new[:, :1])                      # (tq, tk) f32
        l_sc[h] = alpha * l_sc[h] + jnp.sum(p, axis=-1, keepdims=True)
        m_sc[h] = m_new
        pv = jnp.dot(p.astype(v_ref.dtype), v_ref[:, sl],
                     preferred_element_type=jnp.float32)   # (tq, hd)
        acc_sc[h] = acc_sc[h] * alpha[:, :1] + pv

    @pl.when(ki == k_last)
    def _finalize():
        for h in range(num_heads):
            # approx reciprocal (EUP slot): ~1e-3 rel error, within bf16 noise
            # and the reference tolerance used below.
            inv_l = pl.reciprocal(l_sc[h][:, :1], approx=True)
            o_ref[:, h * hd:(h + 1) * hd] = (acc_sc[h] * inv_l).astype(o_ref.dtype)


def flash_attention(q, k, v, num_heads, *, tq_t=512, tk_t=256):
    T, D = q.shape
    hd = D // num_heads

    align = 128 if T % 128 == 0 else 8
    tq = _pick_tile(T, tq_t, align)
    tk = _pick_tile(T, tk_t, align)
    nq = T // tq

    # Triangular schedule: enumerate only lower-triangular (q, kv) block pairs.
    q_idx, k_idx = [], []
    for qi in range(nq):
        k_last = ((qi + 1) * tq - 1) // tk
        for ki in range(k_last + 1):
            q_idx.append(qi)
            k_idx.append(ki)
    q_idx = jnp.asarray(q_idx, dtype=jnp.int32)
    k_idx = jnp.asarray(k_idx, dtype=jnp.int32)
    n_steps = int(q_idx.shape[0])

    grid_spec = pltpu.PrefetchScalarGridSpec(
        num_scalar_prefetch=2,
        grid=(n_steps,),
        in_specs=[
            pl.BlockSpec((tq, D), lambda s, qi, ki: (qi[s], 0)),
            pl.BlockSpec((tk, D), lambda s, qi, ki: (ki[s], 0)),
            pl.BlockSpec((tk, D), lambda s, qi, ki: (ki[s], 0)),
        ],
        out_specs=pl.BlockSpec((tq, D), lambda s, qi, ki: (qi[s], 0)),
        scratch_shapes=[
            pltpu.VMEM((num_heads, tq, 128), jnp.float32),   # m (lane-broadcast)
            pltpu.VMEM((num_heads, tq, 128), jnp.float32),   # l (lane-broadcast)
            pltpu.VMEM((num_heads, tq, hd), jnp.float32),    # acc (head-major)
        ],
    )
    return pl.pallas_call(
        functools.partial(_flash_attn_kernel, num_heads=num_heads, tq=tq, tk=tk),
        out_shape=jax.ShapeDtypeStruct((T, D), q.dtype),
        grid_spec=grid_spec,
        compiler_params=pltpu.CompilerParams(
            dimension_semantics=("arbitrary",),
            vmem_limit_bytes=_VMEM_LIMIT),
    )(q_idx, k_idx, q, k, v)


# ==================================================================
# Kernel C: plain tiled linear  y = x @ W.T  (o_proj, CastedLinear, no bias)
# ==================================================================
def _linear_kernel(x_ref, w_ref, o_ref, acc_ref):
    @pl.when(pl.program_id(2) == 0)
    def _init():
        acc_ref[...] = jnp.zeros_like(acc_ref)

    acc_ref[...] += lax.dot_general(x_ref[...], w_ref[...], (((1,), (1,)), ((), ())),
                                    preferred_element_type=jnp.float32)

    @pl.when(pl.program_id(2) == pl.num_programs(2) - 1)
    def _finalize():
        o_ref[...] = acc_ref[...].astype(o_ref.dtype)


def linear(x, w, *, tm_t=512, tn_t=512, tk_t=2048):
    M, K = x.shape
    N = w.shape[0]
    tm = _pick_tile(M, tm_t, 8)
    tn = _pick_tile(N, tn_t, 128)
    tk = _pick_tile(K, tk_t, 128)
    grid = (N // tn, M // tm, K // tk)   # N outermost: weight tile resident
                                         # across row tiles when tk == K.
    return pl.pallas_call(
        _linear_kernel,
        out_shape=jax.ShapeDtypeStruct((M, N), x.dtype),
        grid=grid,
        in_specs=[pl.BlockSpec((tm, tk), lambda j, i, k: (i, k)),
                  pl.BlockSpec((tn, tk), lambda j, i, k: (j, k))],
        out_specs=pl.BlockSpec((tm, tn), lambda j, i, k: (i, j)),
        scratch_shapes=[pltpu.VMEM((tm, tn), jnp.float32)],
        compiler_params=pltpu.CompilerParams(
            dimension_semantics=("parallel", "parallel", "arbitrary"),
            vmem_limit_bytes=_VMEM_LIMIT),
    )(x, w)


# ==================================================================
# Full SelfAttention.forward (B must be 1; activations stay (T, D) end-to-end)
# ==================================================================
def self_attention_forward(params, x, vi, block_mask=None, *,
                           attn_tq=512, attn_tk=256):
    # TODO(synk): `block_mask` is assumed to carry causal semantics; arbitrary
    #             FlexAttention BlockMasks are not reproduced (the causal mask
    #             and the triangular block schedule are built in-kernel).
    B, T, D = x.shape
    assert B == 1, "Must use batch size = 1 (matches FlexAttention constraint)"
    H = params["num_heads"]
    hd = D // H
    sm_scale = 1.0 / math.sqrt(hd)                  # flex_attention default scale

    xf = x[0]                                       # (T, D)
    vif = vi[0]                                     # (T, D)

    # Rotary tables in float32 (rotate in f32, cast after), expanded to full
    # lane width (T, D) with the sin sign folded so that
    #   rotated = t * cos_full + rotate_half(t) * sin_full.
    inv_freq = (1.0 / 10000.0) ** (jnp.arange(0, hd, 2, dtype=jnp.float32) / hd)
    freqs = jnp.outer(jnp.arange(T, dtype=jnp.float32), inv_freq)    # (T, hd/2)
    cos_h = jnp.concatenate([jnp.cos(freqs), jnp.cos(freqs)], axis=-1)
    sin_h = jnp.concatenate([jnp.sin(freqs), -jnp.sin(freqs)], axis=-1)
    cos_full = jnp.tile(cos_h, (1, H))                               # (T, D) f32
    sin_full = jnp.tile(sin_h, (1, H))

    # Fused Q/K/V projection + all per-token prep (one pallas_call).
    q, k, v = qkv_prep(xf, params["wq"], params["wk"], params["wv"],
                       vif, cos_full, sin_full, params["lambdas"], H, sm_scale)

    # Pure flash attention over the prepped tensors (triangular schedule).
    y = flash_attention(q, k, v, H, tq_t=attn_tq, tk_t=attn_tk)

    out = linear(y, params["wo"])                   # o_proj
    return out[None]                                # (1, T, D)


# ------------------------------------------------------------------
# Pure-JAX reference (sanity check in __main__)
# ------------------------------------------------------------------
def _reference(params, x, vi):
    B, T, D = x.shape
    H = params["num_heads"]
    hd = D // H
    xf = x[0]
    q = xf @ params["wq"].T
    k = xf @ params["wk"].T
    v = xf @ params["wv"].T

    def heads(t):
        return t.reshape(T, H, hd)

    q, k, v, vih = heads(q), heads(k), heads(v), heads(vi[0])
    v = params["lambdas"][0] * v + params["lambdas"][1] * vih

    def rmsn(t):
        ms = jnp.mean(t.astype(jnp.float32) ** 2, axis=-1, keepdims=True)
        return t * lax.rsqrt(ms + jnp.finfo(jnp.float32).eps)

    q, k = rmsn(q), rmsn(k)
    inv_freq = (1.0 / 10000.0) ** (jnp.arange(0, hd, 2, dtype=jnp.float32) / hd)
    freqs = jnp.outer(jnp.arange(T, dtype=jnp.float32), inv_freq)
    cos, sin = jnp.cos(freqs)[:, None, :], jnp.sin(freqs)[:, None, :]

    def rot(t):
        x1, x2 = t[..., :hd // 2], t[..., hd // 2:]
        return jnp.concatenate([x1 * cos + x2 * sin, -x1 * sin + x2 * cos], axis=-1)

    q, k = rot(q), rot(k)
    s = jnp.einsum("qhd,khd->hqk", q, k) * (1.0 / math.sqrt(hd))
    mask = jnp.tril(jnp.ones((T, T), bool))
    s = jnp.where(mask[None], s, -jnp.inf)
    p = jax.nn.softmax(s, axis=-1)
    y = jnp.einsum("hqk,khd->qhd", p, v).reshape(T, D)
    return (y @ params["wo"].T)[None]


# ------------------------------------------------------------------
if __name__ == "__main__":
    def make_case(T, D, H, key):
        k1, k2, k3, k4, k5, k6 = jax.random.split(key, 6)
        # NOTE: the reference module zero-inits o_proj; small random weights
        # are used here so the kernel output is non-trivial.
        params = {
            "num_heads": H,
            "wq": 0.05 * jax.random.normal(k1, (D, D), jnp.float32),
            "wk": 0.05 * jax.random.normal(k2, (D, D), jnp.float32),
            "wv": 0.05 * jax.random.normal(k3, (D, D), jnp.float32),
            "wo": 0.05 * jax.random.normal(k4, (D, D), jnp.float32),
            "lambdas": jnp.array([0.5, 0.5], dtype=jnp.float32),
        }
        x = jax.random.normal(k5, (1, T, D), jnp.float32)
        vi = jax.random.normal(k6, (1, T, D), jnp.float32)
        return params, x, vi

    # Case 1: whole sequence in one attention block.
    params, x, vi = make_case(T=16, D=32, H=4, key=jax.random.PRNGKey(0))
    block_mask = jnp.tril(jnp.ones((16, 16), dtype=jnp.bool_))  # causal stand-in
    out = self_attention_forward(params, x, vi, block_mask)
    jax.block_until_ready(out)
    assert out.shape == x.shape
    ref = _reference(params, x, vi)
    assert bool(jnp.allclose(out, ref, atol=1e-2, rtol=1e-2)), "case 1 mismatch"

    # Case 2: multi-block triangular schedule with tq != tk, exercising the
    # scalar-prefetch index maps, init/finalize phases and the causal mask.
    params2, x2, vi2 = make_case(T=32, D=32, H=4, key=jax.random.PRNGKey(1))
    out2 = self_attention_forward(params2, x2, vi2, None, attn_tq=16, attn_tk=8)
    jax.block_until_ready(out2)
    ref2 = _reference(params2, x2, vi2)
    assert bool(jnp.allclose(out2, ref2, atol=1e-2, rtol=1e-2)), "case 2 mismatch"

    print("KERNEL_OK")
</pallas_src>

<mosaic_0001>
module attributes {stable_mosaic.version = 11 : i64} {
  func.func @_qkv_prep_kernel(%arg0: i32, %arg1: i32, %arg2: i32, %arg3: memref<2xf32, #tpu.memory_space<smem>>, %arg4: memref<16x32xf32, #tpu.memory_space<vmem>>, %arg5: memref<32x32xf32, #tpu.memory_space<vmem>>, %arg6: memref<32x32xf32, #tpu.memory_space<vmem>>, %arg7: memref<32x32xf32, #tpu.memory_space<vmem>>, %arg8: memref<16x32xf32, #tpu.memory_space<vmem>>, %arg9: memref<16x32xf32, #tpu.memory_space<vmem>>, %arg10: memref<16x32xf32, #tpu.memory_space<vmem>>, %arg11: memref<32x32xf32, #tpu.memory_space<vmem>>, %arg12: memref<32x32xf32, #tpu.memory_space<vmem>>, %arg13: memref<16x32xf32, #tpu.memory_space<vmem>>, %arg14: memref<16x32xf32, #tpu.memory_space<vmem>>, %arg15: memref<16x32xf32, #tpu.memory_space<vmem>>, %arg16: memref<16x32xf32, #tpu.memory_space<vmem>>, %arg17: memref<16x32xf32, #tpu.memory_space<vmem>>, %arg18: memref<16x32xf32, #tpu.memory_space<vmem>>) attributes {dimension_semantics = [#tpu.dimension_semantics<parallel>, #tpu.dimension_semantics<parallel>, #tpu.dimension_semantics<arbitrary>], iteration_bounds = array<i64: 1, 1, 1>, scalar_prefetch = 0 : i64, scratch_operands = 3 : i64, tpu.core_type = #tpu.core_type<tc>, window_params = [{transform_indices = @transform_0, window_bounds = array<i64: 2>}, {transform_indices = @transform_1, window_bounds = array<i64: 16, 32>}, {transform_indices = @transform_2, window_bounds = array<i64: 32, 32>}, {transform_indices = @transform_3, window_bounds = array<i64: 32, 32>}, {transform_indices = @transform_4, window_bounds = array<i64: 32, 32>}, {transform_indices = @transform_5, window_bounds = array<i64: 16, 32>}, {transform_indices = @transform_6, window_bounds = array<i64: 16, 32>}, {transform_indices = @transform_7, window_bounds = array<i64: 16, 32>}, {pipeline_mode = #tpu.pipeline_mode<synchronous>, transform_indices = @transform_8, window_bounds = array<i64: 32, 32>}, {pipeline_mode = #tpu.pipeline_mode<synchronous>, transform_indices = @transform_9, window_bounds = array<i64: 32, 32>}, {transform_indices = @transform_10, window_bounds = array<i64: 16, 32>}, {transform_indices = @transform_11, window_bounds = array<i64: 16, 32>}, {transform_indices = @transform_12, window_bounds = array<i64: 16, 32>}]} {
    %c0_i32 = arith.constant 0 : i32
    %0 = arith.cmpi eq, %arg2, %c0_i32 : i32
    %1 = arith.extui %0 : i1 to i32
    %c0_i32_0 = arith.constant 0 : i32
    %2 = arith.cmpi ne, %1, %c0_i32_0 : i32
    scf.if %2 {
      %cst_24 = arith.constant 0.000000e+00 : f32
      %22 = vector.broadcast %cst_24 : f32 to vector<16x32xf32>
      %c0_25 = arith.constant 0 : index
      %c0_26 = arith.constant 0 : index
      %23 = vector.load %arg16[%c0_25, %c0_26] : memref<16x32xf32, #tpu.memory_space<vmem>>, vector<16x32xf32>
      tpu.vector_store %arg16[%c0_25, %c0_26], %22 {strides = array<i32>} : memref<16x32xf32, #tpu.memory_space<vmem>>, vector<16x32xf32>,
      %cst_27 = arith.constant 0.000000e+00 : f32
      %24 = vector.broadcast %cst_27 : f32 to vector<16x32xf32>
      %c0_28 = arith.constant 0 : index
      %c0_29 = arith.constant 0 : index
      %25 = vector.load %arg17[%c0_28, %c0_29] : memref<16x32xf32, #tpu.memory_space<vmem>>, vector<16x32xf32>
      tpu.vector_store %arg17[%c0_28, %c0_29], %24 {strides = array<i32>} : memref<16x32xf32, #tpu.memory_space<vmem>>, vector<16x32xf32>,
      %cst_30 = arith.constant 0.000000e+00 : f32
      %26 = vector.broadcast %cst_30 : f32 to vector<16x32xf32>
      %c0_31 = arith.constant 0 : index
      %c0_32 = arith.constant 0 : index
      %27 = vector.load %arg18[%c0_31, %c0_32] : memref<16x32xf32, #tpu.memory_space<vmem>>, vector<16x32xf32>
      tpu.vector_store %arg18[%c0_31, %c0_32], %26 {strides = array<i32>} : memref<16x32xf32, #tpu.memory_space<vmem>>, vector<16x32xf32>,
    } else {
    }
    %c0 = arith.constant 0 : index
    %c0_1 = arith.constant 0 : index
    %3 = vector.load %arg4[%c0, %c0_1] : memref<16x32xf32, #tpu.memory_space<vmem>>, vector<16x32xf32>
    %c0_2 = arith.constant 0 : index
    %c0_3 = arith.constant 0 : index
    %4 = vector.load %arg16[%c0_2, %c0_3] : memref<16x32xf32, #tpu.memory_space<vmem>>, vector<16x32xf32>
    %c0_4 = arith.constant 0 : index
    %c0_5 = arith.constant 0 : index
    %5 = vector.load %arg5[%c0_4, %c0_5] : memref<32x32xf32, #tpu.memory_space<vmem>>, vector<32x32xf32>
    %cst = arith.constant dense<0.000000e+00> : vector<16x32xf32>
    %6 = tpu.matmul %3, %5, %cst {dimension_numbers = #tpu.dot_dimension_numbers<[1], [1], [0], [0], [0, 0, 1, 0], [], []>} : vector<16x32xf32>, vector<32x32xf32>, vector<16x32xf32> -> vector<16x32xf32>
    %7 = arith.addf %4, %6 : vector<16x32xf32>
    %c0_6 = arith.constant 0 : index
    %c0_7 = arith.constant 0 : index
    %8 = vector.load %arg16[%c0_6, %c0_7] : memref<16x32xf32, #tpu.memory_space<vmem>>, vector<16x32xf32>
    tpu.vector_store %arg16[%c0_6, %c0_7], %7 {strides = array<i32>} : memref<16x32xf32, #tpu.memory_space<vmem>>, vector<16x32xf32>,
    %c0_8 = arith.constant 0 : index
    %c0_9 = arith.constant 0 : index
    %9 = vector.load %arg17[%c0_8, %c0_9] : memref<16x32xf32, #tpu.memory_space<vmem>>, vector<16x32xf32>
    %c0_10 = arith.constant 0 : index
    %c0_11 = arith.constant 0 : index
    %10 = vector.load %arg6[%c0_10, %c0_11] : memref<32x32xf32, #tpu.memory_space<vmem>>, vector<32x32xf32>
    %cst_12 = arith.constant dense<0.000000e+00> : vector<16x32xf32>
    %11 = tpu.matmul %3, %10, %cst_12 {dimension_numbers = #tpu.dot_dimension_numbers<[1], [1], [0], [0], [0, 0, 1, 0], [], []>} : vector<16x32xf32>, vector<32x32xf32>, vector<16x32xf32> -> vector<16x32xf32>
    %12 = arith.addf %9, %11 : vector<16x32xf32>
    %c0_13 = arith.constant 0 : index
    %c0_14 = arith.constant 0 : index
    %13 = vector.load %arg17[%c0_13, %c0_14] : memref<16x32xf32, #tpu.memory_space<vmem>>, vector<16x32xf32>
    tpu.vector_store %arg17[%c0_13, %c0_14], %12 {strides = array<i32>} : memref<16x32xf32, #tpu.memory_space<vmem>>, vector<16x32xf32>,
    %c0_15 = arith.constant 0 : index
    %c0_16 = arith.constant 0 : index
    %14 = vector.load %arg18[%c0_15, %c0_16] : memref<16x32xf32, #tpu.memory_space<vmem>>, vector<16x32xf32>
    %c0_17 = arith.constant 0 : index
    %c0_18 = arith.constant 0 : index
    %15 = vector.load %arg7[%c0_17, %c0_18] : memref<32x32xf32, #tpu.memory_space<vmem>>, vector<32x32xf32>
    %cst_19 = arith.constant dense<0.000000e+00> : vector<16x32xf32>
    %16 = tpu.matmul %3, %15, %cst_19 {dimension_numbers = #tpu.dot_dimension_numbers<[1], [1], [0], [0], [0, 0, 1, 0], [], []>} : vector<16x32xf32>, vector<32x32xf32>, vector<16x32xf32> -> vector<16x32xf32>
    %17 = arith.addf %14, %16 : vector<16x32xf32>
    %c0_20 = arith.constant 0 : index
    %c0_21 = arith.constant 0 : index
    %18 = vector.load %arg18[%c0_20, %c0_21] : memref<16x32xf32, #tpu.memory_space<vmem>>, vector<16x32xf32>
    tpu.vector_store %arg18[%c0_20, %c0_21], %17 {strides = array<i32>} : memref<16x32xf32, #tpu.memory_space<vmem>>, vector<16x32xf32>,
    %c0_i32_22 = arith.constant 0 : i32
    %19 = arith.cmpi eq, %arg2, %c0_i32_22 : i32
    %20 = arith.extui %19 : i1 to i32
    %c0_i32_23 = arith.constant 0 : i32
    %21 = arith.cmpi ne, %20, %c0_i32_23 : i32
    scf.if %21 {
      %c0_24 = arith.constant 0 : index
      %c0_25 = arith.constant 0 : index
      %22 = vector.load %arg9[%c0_24, %c0_25] : memref<16x32xf32, #tpu.memory_space<vmem>>, vector<16x32xf32>
      %c0_26 = arith.constant 0 : index
      %c0_27 = arith.constant 0 : index
      %23 = vector.load %arg10[%c0_26, %c0_27] : memref<16x32xf32, #tpu.memory_space<vmem>>, vector<16x32xf32>
      %c0_28 = arith.constant 0 : index
      %c0_29 = arith.constant 0 : index
      %24 = vector.load %arg11[%c0_28, %c0_29] : memref<32x32xf32, #tpu.memory_space<vmem>>, vector<32x32xf32>
      %c0_30 = arith.constant 0 : index
      %c0_31 = arith.constant 0 : index
      %25 = vector.load %arg12[%c0_30, %c0_31] : memref<32x32xf32, #tpu.memory_space<vmem>>, vector<32x32xf32>
      %c0_32 = arith.constant 0 : index
      %c0_33 = arith.constant 0 : index
      %26 = vector.load %arg16[%c0_32, %c0_33] : memref<16x32xf32, #tpu.memory_space<vmem>>, vector<16x32xf32>
      %27 = arith.mulf %26, %26 : vector<16x32xf32>
      %cst_34 = arith.constant dense<0.000000e+00> : vector<16x32xf32>
      %28 = tpu.matmul %27, %24, %cst_34 {dimension_numbers = #tpu.dot_dimension_numbers<[1], [0], [0], [1], [0, 0, 1, 1], [], []>} : vector<16x32xf32>, vector<32x32xf32>, vector<16x32xf32> -> vector<16x32xf32>
      %cst_35 = arith.constant 1.1920929E-7 : f32
      %29 = vector.broadcast %cst_35 : f32 to vector<16x32xf32>
      %30 = arith.addf %28, %29 : vector<16x32xf32>
      %31 = math.rsqrt %30 : vector<16x32xf32>
      %cst_36 = arith.constant 0.353553385 : f32
      %32 = vector.broadcast %cst_36 : f32 to vector<16x32xf32>
      %33 = arith.mulf %31, %32 : vector<16x32xf32>
      %34 = arith.mulf %26, %33 : vector<16x32xf32>
      %cst_37 = arith.constant dense<0.000000e+00> : vector<16x32xf32>
      %35 = tpu.matmul %34, %25, %cst_37 {dimension_numbers = #tpu.dot_dimension_numbers<[1], [0], [0], [1], [0, 0, 1, 1], [], []>} : vector<16x32xf32>, vector<32x32xf32>, vector<16x32xf32> -> vector<16x32xf32>
      %36 = arith.mulf %34, %22 : vector<16x32xf32>
      %37 = arith.mulf %35, %23 : vector<16x32xf32>
      %38 = arith.addf %36, %37 : vector<16x32xf32>
      %c0_38 = arith.constant 0 : index
      %c0_39 = arith.constant 0 : index
      %39 = vector.load %arg13[%c0_38, %c0_39] : memref<16x32xf32, #tpu.memory_space<vmem>>, vector<16x32xf32>
      tpu.vector_store %arg13[%c0_38, %c0_39], %38 {strides = array<i32>} : memref<16x32xf32, #tpu.memory_space<vmem>>, vector<16x32xf32>,
      %c0_40 = arith.constant 0 : index
      %c0_41 = arith.constant 0 : index
      %40 = vector.load %arg17[%c0_40, %c0_41] : memref<16x32xf32, #tpu.memory_space<vmem>>, vector<16x32xf32>
      %41 = arith.mulf %40, %40 : vector<16x32xf32>
      %cst_42 = arith.constant dense<0.000000e+00> : vector<16x32xf32>
      %42 = tpu.matmul %41, %24, %cst_42 {dimension_numbers = #tpu.dot_dimension_numbers<[1], [0], [0], [1], [0, 0, 1, 1], [], []>} : vector<16x32xf32>, vector<32x32xf32>, vector<16x32xf32> -> vector<16x32xf32>
      %cst_43 = arith.constant 1.1920929E-7 : f32
      %43 = vector.broadcast %cst_43 : f32 to vector<16x32xf32>
      %44 = arith.addf %42, %43 : vector<16x32xf32>
      %45 = math.rsqrt %44 : vector<16x32xf32>
      %cst_44 = arith.constant 1.000000e+00 : f32
      %46 = vector.broadcast %cst_44 : f32 to vector<16x32xf32>
      %47 = arith.mulf %45, %46 : vector<16x32xf32>
      %48 = arith.mulf %40, %47 : vector<16x32xf32>
      %cst_45 = arith.constant dense<0.000000e+00> : vector<16x32xf32>
      %49 = tpu.matmul %48, %25, %cst_45 {dimension_numbers = #tpu.dot_dimension_numbers<[1], [0], [0], [1], [0, 0, 1, 1], [], []>} : vector<16x32xf32>, vector<32x32xf32>, vector<16x32xf32> -> vector<16x32xf32>
      %50 = arith.mulf %48, %22 : vector<16x32xf32>
      %51 = arith.mulf %49, %23 : vector<16x32xf32>
      %52 = arith.addf %50, %51 : vector<16x32xf32>
      %c0_46 = arith.constant 0 : index
      %c0_47 = arith.constant 0 : index
      %53 = vector.load %arg14[%c0_46, %c0_47] : memref<16x32xf32, #tpu.memory_space<vmem>>, vector<16x32xf32>
      tpu.vector_store %arg14[%c0_46, %c0_47], %52 {strides = array<i32>} : memref<16x32xf32, #tpu.memory_space<vmem>>, vector<16x32xf32>,
      %c0_48 = arith.constant 0 : index
      %54 = memref.load %arg3[%c0_48] : memref<2xf32, #tpu.memory_space<smem>>
      %c0_49 = arith.constant 0 : index
      %c0_50 = arith.constant 0 : index
      %55 = vector.load %arg18[%c0_49, %c0_50] : memref<16x32xf32, #tpu.memory_space<vmem>>, vector<16x32xf32>
      %56 = vector.broadcast %54 : f32 to vector<16x32xf32>
      %57 = arith.mulf %56, %55 : vector<16x32xf32>
      %c1 = arith.constant 1 : index
      %58 = memref.load %arg3[%c1] : memref<2xf32, #tpu.memory_space<smem>>
      %c0_51 = arith.constant 0 : index
      %c0_52 = arith.constant 0 : index
      %59 = vector.load %arg8[%c0_51, %c0_52] : memref<16x32xf32, #tpu.memory_space<vmem>>, vector<16x32xf32>
      %60 = vector.broadcast %58 : f32 to vector<16x32xf32>
      %61 = arith.mulf %60, %59 : vector<16x32xf32>
      %62 = arith.addf %57, %61 : vector<16x32xf32>
      %c0_53 = arith.constant 0 : index
      %c0_54 = arith.constant 0 : index
      %63 = vector.load %arg15[%c0_53, %c0_54] : memref<16x32xf32, #tpu.memory_space<vmem>>, vector<16x32xf32>
      tpu.vector_store %arg15[%c0_53, %c0_54], %62 {strides = array<i32>} : memref<16x32xf32, #tpu.memory_space<vmem>>, vector<16x32xf32>,
    } else {
    }
    return
  }
  func.func @transform_0(%arg0: i32, %arg1: i32, %arg2: i32) -> i32 {
    %c0_i32 = arith.constant 0 : i32
    %c0_i32_0 = arith.constant 0 : i32
    return %c0_i32 : i32
  }
  func.func @transform_1(%arg0: i32, %arg1: i32, %arg2: i32) -> (i32, i32) {
    %c0_i32 = arith.constant 0 : i32
    return %arg1, %arg2 : i32, i32
  }
  func.func @transform_2(%arg0: i32, %arg1: i32, %arg2: i32) -> (i32, i32) {
    %c0_i32 = arith.constant 0 : i32
    return %arg0, %arg2 : i32, i32
  }
  func.func @transform_3(%arg0: i32, %arg1: i32, %arg2: i32) -> (i32, i32) {
    %c0_i32 = arith.constant 0 : i32
    return %arg0, %arg2 : i32, i32
  }
  func.func @transform_4(%arg0: i32, %arg1: i32, %arg2: i32) -> (i32, i32) {
    %c0_i32 = arith.constant 0 : i32
    return %arg0, %arg2 : i32, i32
  }
  func.func @transform_5(%arg0: i32, %arg1: i32, %arg2: i32) -> (i32, i32) {
    %c0_i32 = arith.constant 0 : i32
    return %arg1, %arg0 : i32, i32
  }
  func.func @transform_6(%arg0: i32, %arg1: i32, %arg2: i32) -> (i32, i32) {
    %c0_i32 = arith.constant 0 : i32
    return %arg1, %arg0 : i32, i32
  }
  func.func @transform_7(%arg0: i32, %arg1: i32, %arg2: i32) -> (i32, i32) {
    %c0_i32 = arith.constant 0 : i32
    return %arg1, %arg0 : i32, i32
  }
  func.func @transform_8(%arg0: i32, %arg1: i32, %arg2: i32) -> (i32, i32) {
    %c0_i32 = arith.constant 0 : i32
    %c0_i32_0 = arith.constant 0 : i32
    %c0_i32_1 = arith.constant 0 : i32
    return %c0_i32, %c0_i32_0 : i32, i32
  }
  func.func @transform_9(%arg0: i32, %arg1: i32, %arg2: i32) -> (i32, i32) {
    %c0_i32 = arith.constant 0 : i32
    %c0_i32_0 = arith.constant 0 : i32
    %c0_i32_1 = arith.constant 0 : i32
    return %c0_i32, %c0_i32_0 : i32, i32
  }
  func.func @transform_10(%arg0: i32, %arg1: i32, %arg2: i32) -> (i32, i32) {
    %c0_i32 = arith.constant 0 : i32
    return %arg1, %arg0 : i32, i32
  }
  func.func @transform_11(%arg0: i32, %arg1: i32, %arg2: i32) -> (i32, i32) {
    %c0_i32 = arith.constant 0 : i32
    return %arg1, %arg0 : i32, i32
  }
  func.func @transform_12(%arg0: i32, %arg1: i32, %arg2: i32) -> (i32, i32) {
    %c0_i32 = arith.constant 0 : i32
    return %arg1, %arg0 : i32, i32
  }
}

</mosaic_0001>

<llo_original>
// kernel: tpu_custom_call.1
$region0: #{tpu_custom_call.1}
  #allocation0 [shape = 'u32[]', space=smem, size = 0x4, offset = 0x4, fixed_abs, tag = 'smem constant byte address 0x4 - core index']
  #allocation1 [shape = 'u32[144,128]{1,0:T(1,128)}', space=vmem, size = 0x12000, scoped, tag = 'internal scratch']
  #allocation2 [shape = 'f32[16,32]{1,0:T(8,128)}', space=vmem, size = 0x2000, scoped, tag = 'scratch operand']
  #allocation3 [shape = 'f32[16,32]{1,0:T(8,128)}', space=vmem, size = 0x2000, scoped, tag = 'scratch operand']
  #allocation4 [shape = 'f32[16,32]{1,0:T(8,128)}', space=vmem, size = 0x2000, scoped, tag = 'scratch operand']
  %s0 = inlined_call_operand.hbm [shape: f32[2], index: 0, kind: input, shape index: {}]
  %s1 = inlined_call_operand.hbm [shape: f32[16,32], index: 1, kind: input, shape index: {}]
  %s2 = inlined_call_operand.hbm [shape: f32[32,32], index: 2, kind: input, shape index: {}]
  %s3 = inlined_call_operand.hbm [shape: f32[32,32], index: 3, kind: input, shape index: {}]
  %s4 = inlined_call_operand.hbm [shape: f32[32,32], index: 4, kind: input, shape index: {}]
  %s5 = inlined_call_operand.hbm [shape: f32[16,32], index: 5, kind: input, shape index: {}]
  %s6 = inlined_call_operand.hbm [shape: f32[16,32], index: 6, kind: input, shape index: {}]
  %s7 = inlined_call_operand.hbm [shape: f32[16,32], index: 7, kind: input, shape index: {}]
  %s8 = inlined_call_operand.hbm [shape: f32[32,32], index: 8, kind: input, shape index: {}]
  %s9 = inlined_call_operand.vmem [shape: f32[32,32], index: 9, kind: input, shape index: {}]
  %s10 = inlined_call_operand.hbm [shape: f32[16,32], index: 10, kind: output, shape index: {0}]
  %s11 = inlined_call_operand.hbm [shape: f32[16,32], index: 11, kind: output, shape index: {1}]
  %s12 = inlined_call_operand.hbm [shape: f32[16,32], index: 12, kind: output, shape index: {2}]
  %13 = xla_tuple %s10, %s11, %s12
  %s14 = sld [smem:[#allocation0]]
  $region110: #{tpu_custom_call.1} parent=0
    _
  %s16 = ssub.s32 1, %s14
  %s17 = scalar_select 0, %s16, %s14
  $region1: #{tpu_custom_call.1} parent=0
    #allocation5 [shape = 'u8[512]{0}', space=smem, size = 0x200, scoped, tag = 'input window, operand 0, single buffered']
    #allocation6 [shape = 's32[1]{0}', space=sflag, size = 0x4, scoped, tag = 'scoped memory for tpu_custom_call.1']
    #allocation7 [shape = 's32[1]{0}', space=sflag, size = 0x4, scoped, tag = 'scoped memory for tpu_custom_call.1']
    #allocation8 [shape = 's32[1]{0}', space=sflag, size = 0x4, scoped, tag = 'scoped memory for tpu_custom_call.1']
    #allocation9 [shape = 'u8[8192]{0}', space=vmem, size = 0x2000, scoped, tag = 'input window, operand 1, single buffered']
    #allocation10 [shape = 'u8[16384]{0}', space=vmem, size = 0x4000, scoped, tag = 'input window, operand 2, single buffered']
    #allocation11 [shape = 's32[1]{0}', space=sflag, size = 0x4, scoped, tag = 'scoped memory for tpu_custom_call.1']
    #allocation12 [shape = 'u8[16384]{0}', space=vmem, size = 0x4000, scoped, tag = 'input window, operand 3, single buffered']
    #allocation13 [shape = 'u8[16384]{0}', space=vmem, size = 0x4000, scoped, tag = 'input window, operand 4, single buffered']
    #allocation14 [shape = 's32[1]{0}', space=sflag, size = 0x4, scoped, tag = 'scoped memory for tpu_custom_call.1']
    #allocation15 [shape = 'u8[8192]{0}', space=vmem, size = 0x2000, scoped, tag = 'input window, operand 5, single buffered']
    #allocation16 [shape = 'u8[8192]{0}', space=vmem, size = 0x2000, scoped, tag = 'input window, operand 6, single buffered']
    #allocation17 [shape = 's32[1]{0}', space=sflag, size = 0x4, scoped, tag = 'scoped memory for tpu_custom_call.1']
    #allocation18 [shape = 'u8[8192]{0}', space=vmem, size = 0x2000, scoped, tag = 'input window, operand 7, single buffered']
    #allocation19 [shape = 'u8[16384]{0}', space=vmem, size = 0x4000, scoped, tag = 'input window, operand 8, single buffered']
    #allocation20 [shape = 's32[1]{0}', space=sflag, size = 0x4, scoped, tag = 'scoped memory for tpu_custom_call.1']
    #allocation21 [shape = 'u8[8192]{0}', space=vmem, size = 0x2000, scoped, tag = 'output window, operand 0, single buffered']
    #allocation22 [shape = 'u8[8192]{0}', space=vmem, size = 0x2000, scoped, tag = 'output window, operand 1, single buffered']
    #allocation23 [shape = 's32[1]{0}', space=sflag, size = 0x4, scoped, tag = 'scoped memory for tpu_custom_call.1']
    #allocation24 [shape = 'u8[8192]{0}', space=vmem, size = 0x2000, scoped, tag = 'output window, operand 2, single buffered']
    %18 = vsyncpa [#allocation8], 0
    %19 = vsyncpa [#allocation6], 0
    %20 = vsyncpa [#allocation11], 0
    %21 = vsyncpa [#allocation14], 0
    %22 = vsyncpa [#allocation17], 0
    %23 = vsyncpa [#allocation20], 0
    %24 = vsyncpa [#allocation7], 0
    %25 = vsyncpa [#allocation23], 0
    // Predicated region
    $region2: #{tpu_custom_call.1} parent=1 // pred_check
      _
    $region3: #{tpu_custom_call.1} parent=1 // pred_check_branch
      %27 = sbr.rel (0) target = $region5
    $region4: #{tpu_custom_call.1} parent=1 // pred_region
      %s29 = ssub.s32 16, 16
      %30 = vsyncadd [#allocation8], %s29
      %33 = dma.hbm_to_smem %s0, 16, [#allocation5], [#allocation8]
    $region5: #{tpu_custom_call.1} parent=1 // pred_fallthru
      _
    // Predicated region
    $region6: #{tpu_custom_call.1} parent=1 // pred_check
      _
    $region7: #{tpu_custom_call.1} parent=1 // pred_check_branch
      %35 = sbr.rel (0) target = $region9
    $region8: #{tpu_custom_call.1} parent=1 // pred_region
      %s37 = ssub.s32 256, 256
      %38 = vsyncadd [#allocation6], %s37
      %s39 = sshll.u32 [#allocation9], 4
      %s40 = int_to_ptr.vmem [resolvable:$true] %s39
      %45 = dma.hbm_to_vmem [thread:$0]  %s1, 256, %s40, [#allocation6], 128, 128, 8
    $region9: #{tpu_custom_call.1} parent=1 // pred_fallthru
      _
    // Predicated region
    $region10: #{tpu_custom_call.1} parent=1 // pred_check
      _
    $region11: #{tpu_custom_call.1} parent=1 // pred_check_branch
      %47 = sbr.rel (0) target = $region13
    $region12: #{tpu_custom_call.1} parent=1 // pred_region
      %s49 = ssub.s32 512, 512
      %50 = vsyncadd [#allocation11], %s49
      %s51 = sshll.u32 [#allocation10], 4
      %s52 = int_to_ptr.vmem [resolvable:$true] %s51
      %57 = dma.hbm_to_vmem [thread:$0]  %s2, 512, %s52, [#allocation11], 128, 128, 8
    $region13: #{tpu_custom_call.1} parent=1 // pred_fallthru
      _
    // Predicated region
    $region14: #{tpu_custom_call.1} parent=1 // pred_check
      _
    $region15: #{tpu_custom_call.1} parent=1 // pred_check_branch
      %59 = sbr.rel (0) target = $region17
    $region16: #{tpu_custom_call.1} parent=1 // pred_region
      %s61 = ssub.s32 512, 512
      %62 = vsyncadd [#allocation11], %s61
      %s63 = sshll.u32 [#allocation12], 4
      %s64 = int_to_ptr.vmem [resolvable:$true] %s63
      %69 = dma.hbm_to_vmem [thread:$0]  %s3, 512, %s64, [#allocation11], 128, 128, 8
    $region17: #{tpu_custom_call.1} parent=1 // pred_fallthru
      _
    // Predicated region
    $region18: #{tpu_custom_call.1} parent=1 // pred_check
      _
    $region19: #{tpu_custom_call.1} parent=1 // pred_check_branch
      %71 = sbr.rel (0) target = $region21
    $region20: #{tpu_custom_call.1} parent=1 // pred_region
      %s73 = ssub.s32 512, 512
      %74 = vsyncadd [#allocation14], %s73
      %s75 = sshll.u32 [#allocation13], 4
      %s76 = int_to_ptr.vmem [resolvable:$true] %s75
      %81 = dma.hbm_to_vmem [thread:$0]  %s4, 512, %s76, [#allocation14], 128, 128, 8
    $region21: #{tpu_custom_call.1} parent=1 // pred_fallthru
      _
    // Predicated region
    $region22: #{tpu_custom_call.1} parent=1 // pred_check
      _
    $region23: #{tpu_custom_call.1} parent=1 // pred_check_branch
      %83 = sbr.rel (0) target = $region25
    $region24: #{tpu_custom_call.1} parent=1 // pred_region
      %s85 = ssub.s32 256, 256
      %86 = vsyncadd [#allocation14], %s85
      %s87 = sshll.u32 [#allocation15], 4
      %s88 = int_to_ptr.vmem [resolvable:$true] %s87
      %93 = dma.hbm_to_vmem [thread:$0]  %s5, 256, %s88, [#allocation14], 128, 128, 8
    $region25: #{tpu_custom_call.1} parent=1 // pred_fallthru
      _
    // Predicated region
    $region26: #{tpu_custom_call.1} parent=1 // pred_check
      _
    $region27: #{tpu_custom_call.1} parent=1 // pred_check_branch
      %95 = sbr.rel (0) target = $region29
    $region28: #{tpu_custom_call.1} parent=1 // pred_region
      %s97 = ssub.s32 256, 256
      %98 = vsyncadd [#allocation17], %s97
      %s99 = sshll.u32 [#allocation16], 4
      %s100 = int_to_ptr.vmem [resolvable:$true] %s99
      %105 = dma.hbm_to_vmem [thread:$0]  %s6, 256, %s100, [#allocation17], 128, 128, 8
    $region29: #{tpu_custom_call.1} parent=1 // pred_fallthru
      _
    // Predicated region
    $region30: #{tpu_custom_call.1} parent=1 // pred_check
      _
    $region31: #{tpu_custom_call.1} parent=1 // pred_check_branch
      %107 = sbr.rel (0) target = $region33
    $region32: #{tpu_custom_call.1} parent=1 // pred_region
      %s109 = ssub.s32 256, 256
      %110 = vsyncadd [#allocation17], %s109
      %s111 = sshll.u32 [#allocation18], 4
      %s112 = int_to_ptr.vmem [resolvable:$true] %s111
      %117 = dma.hbm_to_vmem [thread:$0]  %s7, 256, %s112, [#allocation17], 128, 128, 8
    $region33: #{tpu_custom_call.1} parent=1 // pred_fallthru
      _
    // Predicated region
    $region34: #{tpu_custom_call.1} parent=1 // pred_check
      _
    $region35: #{tpu_custom_call.1} parent=1 // pred_check_branch
      %119 = sbr.rel (0) target = $region37
    $region36: #{tpu_custom_call.1} parent=1 // pred_region
      %s121 = ssub.s32 512, 512
      %122 = vsyncadd [#allocation20], %s121
      %s123 = sshll.u32 [#allocation19], 4
      %s124 = int_to_ptr.vmem [resolvable:$true] %s123
      %129 = dma.hbm_to_vmem [thread:$0]  %s8, 512, %s124, [#allocation20], 128, 128, 8
    $region37: #{tpu_custom_call.1} parent=1 // pred_fallthru
      _
    // Predicated region
    $region38: #{tpu_custom_call.1} parent=1 // pred_check
      _
    $region39: #{tpu_custom_call.1} parent=1 // pred_check_branch
      %131 = sbr.rel (0) target = $region41
    $region40: #{tpu_custom_call.1} parent=1 // pred_region
      _
    $region41: #{tpu_custom_call.1} parent=1 // pred_fallthru
      _
    // Predicated region
    $region42: #{tpu_custom_call.1} parent=1 // pred_check
      _
    $region43: #{tpu_custom_call.1} parent=1 // pred_check_branch
      %133 = sbr.rel (0) target = $region45
    $region44: #{tpu_custom_call.1} parent=1 // pred_region
      %134 = dma.done [#allocation8], 16
    $region45: #{tpu_custom_call.1} parent=1 // pred_fallthru
      _
    // Predicated region
    $region46: #{tpu_custom_call.1} parent=1 // pred_check
      _
    $region47: #{tpu_custom_call.1} parent=1 // pred_check_branch
      %136 = sbr.rel (0) target = $region49
    $region48: #{tpu_custom_call.1} parent=1 // pred_region
      %137 = dma.done [#allocation6], 256
    $region49: #{tpu_custom_call.1} parent=1 // pred_fallthru
      _
    // Predicated region
    $region50: #{tpu_custom_call.1} parent=1 // pred_check
      _
    $region51: #{tpu_custom_call.1} parent=1 // pred_check_branch
      %139 = sbr.rel (0) target = $region53
    $region52: #{tpu_custom_call.1} parent=1 // pred_region
      %140 = dma.done [#allocation11], 512
    $region53: #{tpu_custom_call.1} parent=1 // pred_fallthru
      _
    // Predicated region
    $region54: #{tpu_custom_call.1} parent=1 // pred_check
      _
    $region55: #{tpu_custom_call.1} parent=1 // pred_check_branch
      %142 = sbr.rel (0) target = $region57
    $region56: #{tpu_custom_call.1} parent=1 // pred_region
      %143 = dma.done [#allocation11], 512
    $region57: #{tpu_custom_call.1} parent=1 // pred_fallthru
      _
    // Predicated region
    $region58: #{tpu_custom_call.1} parent=1 // pred_check
      _
    $region59: #{tpu_custom_call.1} parent=1 // pred_check_branch
      %145 = sbr.rel (0) target = $region61
    $region60: #{tpu_custom_call.1} parent=1 // pred_region
      %146 = dma.done [#allocation14], 512
    $region61: #{tpu_custom_call.1} parent=1 // pred_fallthru
      _
    // Predicated region
    $region62: #{tpu_custom_call.1} parent=1 // pred_check
      _
    $region63: #{tpu_custom_call.1} parent=1 // pred_check_branch
      %148 = sbr.rel (0) target = $region65
    $region64: #{tpu_custom_call.1} parent=1 // pred_region
      %149 = dma.done [#allocation14], 256
    $region65: #{tpu_custom_call.1} parent=1 // pred_fallthru
      _
    // Predicated region
    $region66: #{tpu_custom_call.1} parent=1 // pred_check
      _
    $region67: #{tpu_custom_call.1} parent=1 // pred_check_branch
      %151 = sbr.rel (0) target = $region69
    $region68: #{tpu_custom_call.1} parent=1 // pred_region
      %152 = dma.done [#allocation17], 256
    $region69: #{tpu_custom_call.1} parent=1 // pred_fallthru
      _
    // Predicated region
    $region70: #{tpu_custom_call.1} parent=1 // pred_check
      _
    $region71: #{tpu_custom_call.1} parent=1 // pred_check_branch
      %154 = sbr.rel (0) target = $region73
    $region72: #{tpu_custom_call.1} parent=1 // pred_region
      %155 = dma.done [#allocation17], 256
    $region73: #{tpu_custom_call.1} parent=1 // pred_fallthru
      _
    // Predicated region
    $region74: #{tpu_custom_call.1} parent=1 // pred_check
      _
    $region75: #{tpu_custom_call.1} parent=1 // pred_check_branch
      %157 = sbr.rel (0) target = $region77
    $region76: #{tpu_custom_call.1} parent=1 // pred_region
      %158 = dma.done [#allocation20], 512
    $region77: #{tpu_custom_call.1} parent=1 // pred_fallthru
      _
    %159 = sfence
    %p160 = scmp.eq.s32.totalorder 0, 0
    // Predicated region
    $region78: #{tpu_custom_call.1} parent=1 // pred_check
      %p161 = pneg %p160
    $region79: #{tpu_custom_call.1} parent=1 // pred_check_branch
      %163 = sbr.rel (%p161) target = $region81
    $region80: #{tpu_custom_call.1} parent=1 // pred_region
      %vm164 = vcmask 261120
      %165 = vst.msk [vmem:[#allocation2] sm:$0xff] %vm164, 0.0
      %166 = vst.msk [vmem:[#allocation2 + $0x8] sm:$0xff] %vm164, 0.0
      %167 = vst.msk [vmem:[#allocation3] sm:$0xff] %vm164, 0.0
      %168 = vst.msk [vmem:[#allocation3 + $0x8] sm:$0xff] %vm164, 0.0
      %169 = vst.msk [vmem:[#allocation4] sm:$0xff] %vm164, 0.0
      %170 = vst.msk [vmem:[#allocation4 + $0x8] sm:$0xff] %vm164, 0.0
    $region81: #{tpu_custom_call.1} parent=1 // pred_fallthru
      _
    %v171 = vld [vmem:[#allocation9] sm:$0xff]
    %v172 = vld [vmem:[#allocation9 + $0x8] sm:$0xff]
    %v173 = vld [vmem:[#allocation2] sm:$0xff]
    %v174 = vld [vmem:[#allocation2 + $0x8] sm:$0xff]
    %v175 = vld [vmem:[#allocation10] sm:$0xff]
    %v176 = vld [vmem:[#allocation10 + $0x8] sm:$0xff]
    %v177 = vld [vmem:[#allocation10 + $0x10] sm:$0xff]
    %v178 = vld [vmem:[#allocation10 + $0x18] sm:$0xff]
    %vm179 = vcmask 261120
    %v181 = vsel %vm179, %v171, 0
    %v184 = vsel %vm179, %v172, 0
    %v187 = vsel %vm179, %v175, 0
    %v190 = vsel %vm179, %v176, 0
    %v193 = vsel %vm179, %v177, 0
    %v196 = vsel %vm179, %v178, 0
    %198 = vmatprep.subr.mxu0 0.0
    %199 = vmatpush1.xpose.msra.mxu0 %v187
    %200 = vmatprep.subr.mxu0 0.0
    %201 = vmatpush1.xpose.msra.mxu0 %v190
    %202 = vmatprep.subr.mxu0 0.0
    %203 = vmatpush1.xpose.msra.mxu0 %v193
    %204 = vmatprep.subr.mxu0 0.0
    %205 = vmatpush1.xpose.msra.mxu0 %v196
    %206 = vmatprep.subr.mxu0 0.0
    %207 = vmatpush1.xpose.msra.mxu0 0.0
    %208 = vmatprep.subr.mxu0 0.0
    %209 = vmatpush1.xpose.msra.mxu0 0.0
    %210 = vmatprep.subr.mxu0 0.0
    %211 = vmatpush1.xpose.msra.mxu0 0.0
    %212 = vmatprep.subr.mxu0 0.0
    %213 = vmatpush1.xpose.msra.mxu0 0.0
    %214 = vmatprep.subr.mxu0 0.0
    %215 = vmatpush1.xpose.msra.mxu0 0.0
    %216 = vmatprep.subr.mxu0 0.0
    %217 = vmatpush1.xpose.msra.mxu0 0.0
    %218 = vmatprep.subr.mxu0 0.0
    %219 = vmatpush1.xpose.msra.mxu0 0.0
    %220 = vmatprep.subr.mxu0 0.0
    %221 = vmatpush1.xpose.msra.mxu0 0.0
    %222 = vmatprep.subr.mxu0 0.0
    %223 = vmatpush1.xpose.msra.mxu0 0.0
    %224 = vmatprep.subr.mxu0 0.0
    %225 = vmatpush1.xpose.msra.mxu0 0.0
    %226 = vmatprep.subr.mxu0 0.0
    %227 = vmatpush1.xpose.msra.mxu0 0.0
    %228 = vmatprep.subr.mxu0 0.0
    %229 = vmatpush1.xpose.msra.mxu0 0.0
    %230 = vmatprep.subr.mxu0 0.0
    %231 = vmatpush1.xpose.msra.mxu0 0.0
    %232 = vmatprep.subr.mxu0 0.0
    %233 = vmatpush1.xpose.msra.mxu0 0.0
    %234 = vmatprep.subr.mxu0 0.0
    %235 = vmatpush1.xpose.msra.mxu0 0.0
    %236 = vmatprep.subr.mxu0 0.0
    %237 = vmatpush1.xpose.msra.mxu0 0.0
    %238 = vmatprep.subr.mxu0 0.0
    %239 = vmatpush1.xpose.msra.mxu0 0.0
    %240 = vmatprep.subr.mxu0 0.0
    %241 = vmatpush1.xpose.msra.mxu0 0.0
    %242 = vmatprep.subr.mxu0 0.0
    %243 = vmatpush1.xpose.msra.mxu0 0.0
    %244 = vmatprep.subr.mxu0 0.0
    %245 = vmatpush1.xpose.msra.mxu0 0.0
    %246 = vmatprep.subr.mxu0 0.0
    %247 = vmatpush1.xpose.msra.mxu0 0.0
    %248 = vmatprep.subr.mxu0 0.0
    %249 = vmatpush1.xpose.msra.mxu0 0.0
    %250 = vmatprep.subr.mxu0 0.0
    %251 = vmatpush1.xpose.msra.mxu0 0.0
    %252 = vmatprep.subr.mxu0 0.0
    %253 = vmatpush1.xpose.msra.mxu0 0.0
    %254 = vmatprep.subr.mxu0 0.0
    %255 = vmatpush1.xpose.msra.mxu0 0.0
    %256 = vmatprep.subr.mxu0 0.0
    %257 = vmatpush1.xpose.msra.mxu0 0.0
    %258 = vmatprep.subr.mxu0 0.0
    %259 = vmatpush1.xpose.msra.mxu0 0.0
    %260 = vmatprep.subr.mxu0 0.0
    %261 = vmatpush1.xpose.msra.mxu0 0.0
    %262 = vmatprep.mubr.f32.mxu0 0.0
    %263 = vmatmul.mubr.f32.gmra.mrb[0].mxu0 %v181
    %v264 = vpop.f32.mrb[0].mxu0
    %v265 = vadd.f32 0.0, %v264
    %v266 = vpop.f32.mrb[0].mxu0
    %267 = vmatprep.mubr.f32.mxu0 0.0
    %268 = vmatmul.mubr.f32.gmra.mrb[0].mxu0 %v184
    %v269 = vpop.f32.mrb[0].mxu0
    %v270 = vadd.f32 0.0, %v269
    %v271 = vpop.f32.mrb[0].mxu0
    %272 = vdwg.mxu0
    %v273 = vadd.f32 %v173, %v265
    %v274 = vadd.f32 %v174, %v270
    %275 = vst.msk [vmem:[#allocation2] sm:$0xff] %vm179, %v273
    %276 = vst.msk [vmem:[#allocation2 + $0x8] sm:$0xff] %vm179, %v274
    %v277 = vld [vmem:[#allocation3] sm:$0xff]
    %v278 = vld [vmem:[#allocation3 + $0x8] sm:$0xff]
    %v279 = vld [vmem:[#allocation12] sm:$0xff]
    %v280 = vld [vmem:[#allocation12 + $0x8] sm:$0xff]
    %v281 = vld [vmem:[#allocation12 + $0x10] sm:$0xff]
    %v282 = vld [vmem:[#allocation12 + $0x18] sm:$0xff]
    %v284 = vsel %vm179, %v279, 0
    %v287 = vsel %vm179, %v280, 0
    %v290 = vsel %vm179, %v281, 0
    %v293 = vsel %vm179, %v282, 0
    %295 = vmatprep.subr.mxu0 0.0
    %296 = vmatpush1.xpose.msra.mxu0 %v284
    %297 = vmatprep.subr.mxu0 0.0
    %298 = vmatpush1.xpose.msra.mxu0 %v287
    %299 = vmatprep.subr.mxu0 0.0
    %300 = vmatpush1.xpose.msra.mxu0 %v290
    %301 = vmatprep.subr.mxu0 0.0
    %302 = vmatpush1.xpose.msra.mxu0 %v293
    %303 = vmatprep.subr.mxu0 0.0
    %304 = vmatpush1.xpose.msra.mxu0 0.0
    %305 = vmatprep.subr.mxu0 0.0
    %306 = vmatpush1.xpose.msra.mxu0 0.0
    %307 = vmatprep.subr.mxu0 0.0
    %308 = vmatpush1.xpose.msra.mxu0 0.0
    %309 = vmatprep.subr.mxu0 0.0
    %310 = vmatpush1.xpose.msra.mxu0 0.0
    %311 = vmatprep.subr.mxu0 0.0
    %312 = vmatpush1.xpose.msra.mxu0 0.0
    %313 = vmatprep.subr.mxu0 0.0
    %314 = vmatpush1.xpose.msra.mxu0 0.0
    %315 = vmatprep.subr.mxu0 0.0
    %316 = vmatpush1.xpose.msra.mxu0 0.0
    %317 = vmatprep.subr.mxu0 0.0
    %318 = vmatpush1.xpose.msra.mxu0 0.0
    %319 = vmatprep.subr.mxu0 0.0
    %320 = vmatpush1.xpose.msra.mxu0 0.0
    %321 = vmatprep.subr.mxu0 0.0
    %322 = vmatpush1.xpose.msra.mxu0 0.0
    %323 = vmatprep.subr.mxu0 0.0
    %324 = vmatpush1.xpose.msra.mxu0 0.0
    %325 = vmatprep.subr.mxu0 0.0
    %326 = vmatpush1.xpose.msra.mxu0 0.0
    %327 = vmatprep.subr.mxu0 0.0
    %328 = vmatpush1.xpose.msra.mxu0 0.0
    %329 = vmatprep.subr.mxu0 0.0
    %330 = vmatpush1.xpose.msra.mxu0 0.0
    %331 = vmatprep.subr.mxu0 0.0
    %332 = vmatpush1.xpose.msra.mxu0 0.0
    %333 = vmatprep.subr.mxu0 0.0
    %334 = vmatpush1.xpose.msra.mxu0 0.0
    %335 = vmatprep.subr.mxu0 0.0
    %336 = vmatpush1.xpose.msra.mxu0 0.0
    %337 = vmatprep.subr.mxu0 0.0
    %338 = vmatpush1.xpose.msra.mxu0 0.0
    %339 = vmatprep.subr.mxu0 0.0
    %340 = vmatpush1.xpose.msra.mxu0 0.0
    %341 = vmatprep.subr.mxu0 0.0
    %342 = vmatpush1.xpose.msra.mxu0 0.0
    %343 = vmatprep.subr.mxu0 0.0
    %344 = vmatpush1.xpose.msra.mxu0 0.0
    %345 = vmatprep.subr.mxu0 0.0
    %346 = vmatpush1.xpose.msra.mxu0 0.0
    %347 = vmatprep.subr.mxu0 0.0
    %348 = vmatpush1.xpose.msra.mxu0 0.0
    %349 = vmatprep.subr.mxu0 0.0
    %350 = vmatpush1.xpose.msra.mxu0 0.0
    %351 = vmatprep.subr.mxu0 0.0
    %352 = vmatpush1.xpose.msra.mxu0 0.0
    %353 = vmatprep.subr.mxu0 0.0
    %354 = vmatpush1.xpose.msra.mxu0 0.0
    %355 = vmatprep.subr.mxu0 0.0
    %356 = vmatpush1.xpose.msra.mxu0 0.0
    %357 = vmatprep.subr.mxu0 0.0
    %358 = vmatpush1.xpose.msra.mxu0 0.0
    %359 = vmatprep.mubr.f32.mxu0 0.0
    %360 = vmatmul.mubr.f32.gmra.mrb[0].mxu0 %v181
    %v361 = vpop.f32.mrb[0].mxu0
    %v362 = vadd.f32 0.0, %v361
    %v363 = vpop.f32.mrb[0].mxu0
    %364 = vmatprep.mubr.f32.mxu0 0.0
    %365 = vmatmul.mubr.f32.gmra.mrb[0].mxu0 %v184
    %v366 = vpop.f32.mrb[0].mxu0
    %v367 = vadd.f32 0.0, %v366
    %v368 = vpop.f32.mrb[0].mxu0
    %369 = vdwg.mxu0
    %v370 = vadd.f32 %v277, %v362
    %v371 = vadd.f32 %v278, %v367
    %372 = vst.msk [vmem:[#allocation3] sm:$0xff] %vm179, %v370
    %373 = vst.msk [vmem:[#allocation3 + $0x8] sm:$0xff] %vm179, %v371
    %v374 = vld [vmem:[#allocation4] sm:$0xff]
    %v375 = vld [vmem:[#allocation4 + $0x8] sm:$0xff]
    %v376 = vld [vmem:[#allocation13] sm:$0xff]
    %v377 = vld [vmem:[#allocation13 + $0x8] sm:$0xff]
    %v378 = vld [vmem:[#allocation13 + $0x10] sm:$0xff]
    %v379 = vld [vmem:[#allocation13 + $0x18] sm:$0xff]
    %v381 = vsel %vm179, %v376, 0
    %v384 = vsel %vm179, %v377, 0
    %v387 = vsel %vm179, %v378, 0
    %v390 = vsel %vm179, %v379, 0
    %392 = vmatprep.subr.mxu0 0.0
    %393 = vmatpush1.xpose.msra.mxu0 %v381
    %394 = vmatprep.subr.mxu0 0.0
    %395 = vmatpush1.xpose.msra.mxu0 %v384
    %396 = vmatprep.subr.mxu0 0.0
    %397 = vmatpush1.xpose.msra.mxu0 %v387
    %398 = vmatprep.subr.mxu0 0.0
    %399 = vmatpush1.xpose.msra.mxu0 %v390
    %400 = vmatprep.subr.mxu0 0.0
    %401 = vmatpush1.xpose.msra.mxu0 0.0
    %402 = vmatprep.subr.mxu0 0.0
    %403 = vmatpush1.xpose.msra.mxu0 0.0
    %404 = vmatprep.subr.mxu0 0.0
    %405 = vmatpush1.xpose.msra.mxu0 0.0
    %406 = vmatprep.subr.mxu0 0.0
    %407 = vmatpush1.xpose.msra.mxu0 0.0
    %408 = vmatprep.subr.mxu0 0.0
    %409 = vmatpush1.xpose.msra.mxu0 0.0
    %410 = vmatprep.subr.mxu0 0.0
    %411 = vmatpush1.xpose.msra.mxu0 0.0
    %412 = vmatprep.subr.mxu0 0.0
    %413 = vmatpush1.xpose.msra.mxu0 0.0
    %414 = vmatprep.subr.mxu0 0.0
    %415 = vmatpush1.xpose.msra.mxu0 0.0
    %416 = vmatprep.subr.mxu0 0.0
    %417 = vmatpush1.xpose.msra.mxu0 0.0
    %418 = vmatprep.subr.mxu0 0.0
    %419 = vmatpush1.xpose.msra.mxu0 0.0
    %420 = vmatprep.subr.mxu0 0.0
    %421 = vmatpush1.xpose.msra.mxu0 0.0
    %422 = vmatprep.subr.mxu0 0.0
    %423 = vmatpush1.xpose.msra.mxu0 0.0
    %424 = vmatprep.subr.mxu0 0.0
    %425 = vmatpush1.xpose.msra.mxu0 0.0
    %426 = vmatprep.subr.mxu0 0.0
    %427 = vmatpush1.xpose.msra.mxu0 0.0
    %428 = vmatprep.subr.mxu0 0.0
    %429 = vmatpush1.xpose.msra.mxu0 0.0
    %430 = vmatprep.subr.mxu0 0.0
    %431 = vmatpush1.xpose.msra.mxu0 0.0
    %432 = vmatprep.subr.mxu0 0.0
    %433 = vmatpush1.xpose.msra.mxu0 0.0
    %434 = vmatprep.subr.mxu0 0.0
    %435 = vmatpush1.xpose.msra.mxu0 0.0
    %436 = vmatprep.subr.mxu0 0.0
    %437 = vmatpush1.xpose.msra.mxu0 0.0
    %438 = vmatprep.subr.mxu0 0.0
    %439 = vmatpush1.xpose.msra.mxu0 0.0
    %440 = vmatprep.subr.mxu0 0.0
    %441 = vmatpush1.xpose.msra.mxu0 0.0
    %442 = vmatprep.subr.mxu0 0.0
    %443 = vmatpush1.xpose.msra.mxu0 0.0
    %444 = vmatprep.subr.mxu0 0.0
    %445 = vmatpush1.xpose.msra.mxu0 0.0
    %446 = vmatprep.subr.mxu0 0.0
    %447 = vmatpush1.xpose.msra.mxu0 0.0
    %448 = vmatprep.subr.mxu0 0.0
    %449 = vmatpush1.xpose.msra.mxu0 0.0
    %450 = vmatprep.subr.mxu0 0.0
    %451 = vmatpush1.xpose.msra.mxu0 0.0
    %452 = vmatprep.subr.mxu0 0.0
    %453 = vmatpush1.xpose.msra.mxu0 0.0
    %454 = vmatprep.subr.mxu0 0.0
    %455 = vmatpush1.xpose.msra.mxu0 0.0
    %456 = vmatprep.mubr.f32.mxu0 0.0
    %457 = vmatmul.mubr.f32.gmra.mrb[0].mxu0 %v181
    %v458 = vpop.f32.mrb[0].mxu0
    %v459 = vadd.f32 0.0, %v458
    %v460 = vpop.f32.mrb[0].mxu0
    %461 = vmatprep.mubr.f32.mxu0 0.0
    %462 = vmatmul.mubr.f32.gmra.mrb[0].mxu0 %v184
    %v463 = vpop.f32.mrb[0].mxu0
    %v464 = vadd.f32 0.0, %v463
    %v465 = vpop.f32.mrb[0].mxu0
    %466 = vdwg.mxu0
    %v467 = vadd.f32 %v374, %v459
    %v468 = vadd.f32 %v375, %v464
    %469 = vst.msk [vmem:[#allocation4] sm:$0xff] %vm179, %v467
    %470 = vst.msk [vmem:[#allocation4 + $0x8] sm:$0xff] %vm179, %v468
    // Predicated region
    $region82: #{tpu_custom_call.1} parent=1 // pred_check
      %p471 = pneg %p160
    $region83: #{tpu_custom_call.1} parent=1 // pred_check_branch
      %473 = sbr.rel (%p471) target = $region85
    $region84: #{tpu_custom_call.1} parent=1 // pred_region
      %v474 = vld [vmem:[#allocation16] sm:$0xff]
      %v475 = vld [vmem:[#allocation16 + $0x8] sm:$0xff]
      %v476 = vld [vmem:[#allocation18] sm:$0xff]
      %v477 = vld [vmem:[#allocation18 + $0x8] sm:$0xff]
      %v478 = vld [vmem:[#allocation19] sm:$0xff]
      %v479 = vld [vmem:[#allocation19 + $0x8] sm:$0xff]
      %v480 = vld [vmem:[#allocation19 + $0x10] sm:$0xff]
      %v481 = vld [vmem:[#allocation19 + $0x18] sm:$0xff]
      %v482 = vld [vmem:[%s9] sm:$0xff]
      %v483 = vld [vmem:[%s9 + $0x8] sm:$0xff]
      %v484 = vld [vmem:[%s9 + $0x10] sm:$0xff]
      %v485 = vld [vmem:[%s9 + $0x18] sm:$0xff]
      %v486 = vld [vmem:[#allocation2] sm:$0xff]
      %v487 = vld [vmem:[#allocation2 + $0x8] sm:$0xff]
      %v488 = vmul.f32 %v486, %v486
      %v489 = vmul.f32 %v487, %v487
      %v491 = vsel %vm179, %v488, 0
      %v494 = vsel %vm179, %v489, 0
      %496 = vmatprep.subr.mxu0 0.0
      %497 = vmatpush1.msra.mxu0 %v478
      %498 = vmatprep.subr.mxu0 0.0
      %499 = vmatpush1.msra.mxu0 %v479
      %500 = vmatprep.subr.mxu0 0.0
      %501 = vmatpush1.msra.mxu0 %v480
      %502 = vmatprep.subr.mxu0 0.0
      %503 = vmatpush1.msra.mxu0 %v481
      %504 = vmatprep.subr.mxu0 0.0
      %505 = vmatpush1.msra.mxu0 0.0
      %506 = vmatprep.subr.mxu0 0.0
      %507 = vmatpush1.msra.mxu0 0.0
      %508 = vmatprep.subr.mxu0 0.0
      %509 = vmatpush1.msra.mxu0 0.0
      %510 = vmatprep.subr.mxu0 0.0
      %511 = vmatpush1.msra.mxu0 0.0
      %512 = vmatprep.subr.mxu0 0.0
      %513 = vmatpush1.msra.mxu0 0.0
      %514 = vmatprep.subr.mxu0 0.0
      %515 = vmatpush1.msra.mxu0 0.0
      %516 = vmatprep.subr.mxu0 0.0
      %517 = vmatpush1.msra.mxu0 0.0
      %518 = vmatprep.subr.mxu0 0.0
      %519 = vmatpush1.msra.mxu0 0.0
      %520 = vmatprep.subr.mxu0 0.0
      %521 = vmatpush1.msra.mxu0 0.0
      %522 = vmatprep.subr.mxu0 0.0
      %523 = vmatpush1.msra.mxu0 0.0
      %524 = vmatprep.subr.mxu0 0.0
      %525 = vmatpush1.msra.mxu0 0.0
      %526 = vmatprep.subr.mxu0 0.0
      %527 = vmatpush1.msra.mxu0 0.0
      %528 = vmatprep.subr.mxu0 0.0
      %529 = vmatpush1.msra.mxu0 0.0
      %530 = vmatprep.subr.mxu0 0.0
      %531 = vmatpush1.msra.mxu0 0.0
      %532 = vmatprep.subr.mxu0 0.0
      %533 = vmatpush1.msra.mxu0 0.0
      %534 = vmatprep.subr.mxu0 0.0
      %535 = vmatpush1.msra.mxu0 0.0
      %536 = vmatprep.subr.mxu0 0.0
      %537 = vmatpush1.msra.mxu0 0.0
      %538 = vmatprep.subr.mxu0 0.0
      %539 = vmatpush1.msra.mxu0 0.0
      %540 = vmatprep.subr.mxu0 0.0
      %541 = vmatpush1.msra.mxu0 0.0
      %542 = vmatprep.subr.mxu0 0.0
      %543 = vmatpush1.msra.mxu0 0.0
      %544 = vmatprep.subr.mxu0 0.0
      %545 = vmatpush1.msra.mxu0 0.0
      %546 = vmatprep.subr.mxu0 0.0
      %547 = vmatpush1.msra.mxu0 0.0
      %548 = vmatprep.subr.mxu0 0.0
      %549 = vmatpush1.msra.mxu0 0.0
      %550 = vmatprep.subr.mxu0 0.0
      %551 = vmatpush1.msra.mxu0 0.0
      %552 = vmatprep.subr.mxu0 0.0
      %553 = vmatpush1.msra.mxu0 0.0
      %554 = vmatprep.subr.mxu0 0.0
      %555 = vmatpush1.msra.mxu0 0.0
      %556 = vmatprep.subr.mxu0 0.0
      %557 = vmatpush1.msra.mxu0 0.0
      %558 = vmatprep.subr.mxu0 0.0
      %559 = vmatpush1.msra.mxu0 0.0
      %560 = vmatprep.mubr.f32.mxu0 0.0
      %561 = vmatmul.mubr.f32.gmra.mrb[0].mxu0 %v491
      %v562 = vpop.f32.mrb[0].mxu0
      %v563 = vadd.f32 1.1920929e-07, %v562
      %v564 = vpop.f32.mrb[0].mxu0
      %565 = vmatprep.mubr.f32.mxu0 0.0
      %566 = vmatmul.mubr.f32.gmra.mrb[0].mxu0 %v494
      %v567 = vpop.f32.mrb[0].mxu0
      %v568 = vadd.f32 1.1920929e-07, %v567
      %v569 = vpop.f32.mrb[0].mxu0
      %570 = vdwg.mxu0
      %v571 = vrsqrt.pop %v563
      %v572 = vrsqrt.pop %v568
      %v573 = vmul.f32 %v571, 0.35355338
      %v574 = vmul.f32 %v572, 0.35355338
      %v575 = vmul.f32 %v486, %v573
      %v576 = vmul.f32 %v487, %v574
      %v578 = vsel %vm179, %v575, 0
      %v581 = vsel %vm179, %v576, 0
      %583 = vmatprep.subr.mxu0 0.0
      %584 = vmatpush1.msra.mxu0 %v482
      %585 = vmatprep.subr.mxu0 0.0
      %586 = vmatpush1.msra.mxu0 %v483
      %587 = vmatprep.subr.mxu0 0.0
      %588 = vmatpush1.msra.mxu0 %v484
      %589 = vmatprep.subr.mxu0 0.0
      %590 = vmatpush1.msra.mxu0 %v485
      %591 = vmatprep.subr.mxu0 0.0
      %592 = vmatpush1.msra.mxu0 0.0
      %593 = vmatprep.subr.mxu0 0.0
      %594 = vmatpush1.msra.mxu0 0.0
      %595 = vmatprep.subr.mxu0 0.0
      %596 = vmatpush1.msra.mxu0 0.0
      %597 = vmatprep.subr.mxu0 0.0
      %598 = vmatpush1.msra.mxu0 0.0
      %599 = vmatprep.subr.mxu0 0.0
      %600 = vmatpush1.msra.mxu0 0.0
      %601 = vmatprep.subr.mxu0 0.0
      %602 = vmatpush1.msra.mxu0 0.0
      %603 = vmatprep.subr.mxu0 0.0
      %604 = vmatpush1.msra.mxu0 0.0
      %605 = vmatprep.subr.mxu0 0.0
      %606 = vmatpush1.msra.mxu0 0.0
      %607 = vmatprep.subr.mxu0 0.0
      %608 = vmatpush1.msra.mxu0 0.0
      %609 = vmatprep.subr.mxu0 0.0
      %610 = vmatpush1.msra.mxu0 0.0
      %611 = vmatprep.subr.mxu0 0.0
      %612 = vmatpush1.msra.mxu0 0.0
      %613 = vmatprep.subr.mxu0 0.0
      %614 = vmatpush1.msra.mxu0 0.0
      %615 = vmatprep.subr.mxu0 0.0
      %616 = vmatpush1.msra.mxu0 0.0
      %617 = vmatprep.subr.mxu0 0.0
      %618 = vmatpush1.msra.mxu0 0.0
      %619 = vmatprep.subr.mxu0 0.0
      %620 = vmatpush1.msra.mxu0 0.0
      %621 = vmatprep.subr.mxu0 0.0
      %622 = vmatpush1.msra.mxu0 0.0
      %623 = vmatprep.subr.mxu0 0.0
      %624 = vmatpush1.msra.mxu0 0.0
      %625 = vmatprep.subr.mxu0 0.0
      %626 = vmatpush1.msra.mxu0 0.0
      %627 = vmatprep.subr.mxu0 0.0
      %628 = vmatpush1.msra.mxu0 0.0
      %629 = vmatprep.subr.mxu0 0.0
      %630 = vmatpush1.msra.mxu0 0.0
      %631 = vmatprep.subr.mxu0 0.0
      %632 = vmatpush1.msra.mxu0 0.0
      %633 = vmatprep.subr.mxu0 0.0
      %634 = vmatpush1.msra.mxu0 0.0
      %635 = vmatprep.subr.mxu0 0.0
      %636 = vmatpush1.msra.mxu0 0.0
      %637 = vmatprep.subr.mxu0 0.0
      %638 = vmatpush1.msra.mxu0 0.0
      %639 = vmatprep.subr.mxu0 0.0
      %640 = vmatpush1.msra.mxu0 0.0
      %641 = vmatprep.subr.mxu0 0.0
      %642 = vmatpush1.msra.mxu0 0.0
      %643 = vmatprep.subr.mxu0 0.0
      %644 = vmatpush1.msra.mxu0 0.0
      %645 = vmatprep.subr.mxu0 0.0
      %646 = vmatpush1.msra.mxu0 0.0
      %647 = vmatprep.mubr.f32.mxu0 0.0
      %648 = vmatmul.mubr.f32.gmra.mrb[0].mxu0 %v578
      %v649 = vpop.f32.mrb[0].mxu0
      %v650 = vadd.f32 0.0, %v649
      %v651 = vpop.f32.mrb[0].mxu0
      %652 = vmatprep.mubr.f32.mxu0 0.0
      %653 = vmatmul.mubr.f32.gmra.mrb[0].mxu0 %v581
      %v654 = vpop.f32.mrb[0].mxu0
      %v655 = vadd.f32 0.0, %v654
      %v656 = vpop.f32.mrb[0].mxu0
      %657 = vdwg.mxu0
      %v658 = vmul.f32 %v575, %v474
      %v659 = vmul.f32 %v576, %v475
      %v660 = vmul.f32 %v650, %v476
      %v661 = vmul.f32 %v655, %v477
      %v662 = vadd.f32 %v658, %v660
      %v663 = vadd.f32 %v659, %v661
      %664 = vst.msk [vmem:[#allocation21] sm:$0xff] %vm179, %v662
      %665 = vst.msk [vmem:[#allocation21 + $0x8] sm:$0xff] %vm179, %v663
      %v666 = vld [vmem:[#allocation3] sm:$0xff]
      %v667 = vld [vmem:[#allocation3 + $0x8] sm:$0xff]
      %v668 = vmul.f32 %v666, %v666
      %v669 = vmul.f32 %v667, %v667
      %v671 = vsel %vm179, %v668, 0
      %v674 = vsel %vm179, %v669, 0
      %676 = vmatprep.subr.mxu0 0.0
      %677 = vmatpush1.msra.mxu0 %v478
      %678 = vmatprep.subr.mxu0 0.0
      %679 = vmatpush1.msra.mxu0 %v479
      %680 = vmatprep.subr.mxu0 0.0
      %681 = vmatpush1.msra.mxu0 %v480
      %682 = vmatprep.subr.mxu0 0.0
      %683 = vmatpush1.msra.mxu0 %v481
      %684 = vmatprep.subr.mxu0 0.0
      %685 = vmatpush1.msra.mxu0 0.0
      %686 = vmatprep.subr.mxu0 0.0
      %687 = vmatpush1.msra.mxu0 0.0
      %688 = vmatprep.subr.mxu0 0.0
      %689 = vmatpush1.msra.mxu0 0.0
      %690 = vmatprep.subr.mxu0 0.0
      %691 = vmatpush1.msra.mxu0 0.0
      %692 = vmatprep.subr.mxu0 0.0
      %693 = vmatpush1.msra.mxu0 0.0
      %694 = vmatprep.subr.mxu0 0.0
      %695 = vmatpush1.msra.mxu0 0.0
      %696 = vmatprep.subr.mxu0 0.0
      %697 = vmatpush1.msra.mxu0 0.0
      %698 = vmatprep.subr.mxu0 0.0
      %699 = vmatpush1.msra.mxu0 0.0
      %700 = vmatprep.subr.mxu0 0.0
      %701 = vmatpush1.msra.mxu0 0.0
      %702 = vmatprep.subr.mxu0 0.0
      %703 = vmatpush1.msra.mxu0 0.0
      %704 = vmatprep.subr.mxu0 0.0
      %705 = vmatpush1.msra.mxu0 0.0
      %706 = vmatprep.subr.mxu0 0.0
      %707 = vmatpush1.msra.mxu0 0.0
      %708 = vmatprep.subr.mxu0 0.0
      %709 = vmatpush1.msra.mxu0 0.0
      %710 = vmatprep.subr.mxu0 0.0
      %711 = vmatpush1.msra.mxu0 0.0
      %712 = vmatprep.subr.mxu0 0.0
      %713 = vmatpush1.msra.mxu0 0.0
      %714 = vmatprep.subr.mxu0 0.0
      %715 = vmatpush1.msra.mxu0 0.0
      %716 = vmatprep.subr.mxu0 0.0
      %717 = vmatpush1.msra.mxu0 0.0
      %718 = vmatprep.subr.mxu0 0.0
      %719 = vmatpush1.msra.mxu0 0.0
      %720 = vmatprep.subr.mxu0 0.0
      %721 = vmatpush1.msra.mxu0 0.0
      %722 = vmatprep.subr.mxu0 0.0
      %723 = vmatpush1.msra.mxu0 0.0
      %724 = vmatprep.subr.mxu0 0.0
      %725 = vmatpush1.msra.mxu0 0.0
      %726 = vmatprep.subr.mxu0 0.0
      %727 = vmatpush1.msra.mxu0 0.0
      %728 = vmatprep.subr.mxu0 0.0
      %729 = vmatpush1.msra.mxu0 0.0
      %730 = vmatprep.subr.mxu0 0.0
      %731 = vmatpush1.msra.mxu0 0.0
      %732 = vmatprep.subr.mxu0 0.0
      %733 = vmatpush1.msra.mxu0 0.0
      %734 = vmatprep.subr.mxu0 0.0
      %735 = vmatpush1.msra.mxu0 0.0
      %736 = vmatprep.subr.mxu0 0.0
      %737 = vmatpush1.msra.mxu0 0.0
      %738 = vmatprep.subr.mxu0 0.0
      %739 = vmatpush1.msra.mxu0 0.0
      %740 = vmatprep.mubr.f32.mxu0 0.0
      %741 = vmatmul.mubr.f32.gmra.mrb[0].mxu0 %v671
      %v742 = vpop.f32.mrb[0].mxu0
      %v743 = vadd.f32 1.1920929e-07, %v742
      %v744 = vpop.f32.mrb[0].mxu0
      %745 = vmatprep.mubr.f32.mxu0 0.0
      %746 = vmatmul.mubr.f32.gmra.mrb[0].mxu0 %v674
      %v747 = vpop.f32.mrb[0].mxu0
      %v748 = vadd.f32 1.1920929e-07, %v747
      %v749 = vpop.f32.mrb[0].mxu0
      %750 = vdwg.mxu0
      %v751 = vrsqrt.pop %v743
      %v752 = vrsqrt.pop %v748
      %v753 = vmul.f32 %v666, %v751
      %v754 = vmul.f32 %v667, %v752
      %v756 = vsel %vm179, %v753, 0
      %v759 = vsel %vm179, %v754, 0
      %761 = vmatprep.subr.mxu0 0.0
      %762 = vmatpush1.msra.mxu0 %v482
      %763 = vmatprep.subr.mxu0 0.0
      %764 = vmatpush1.msra.mxu0 %v483
      %765 = vmatprep.subr.mxu0 0.0
      %766 = vmatpush1.msra.mxu0 %v484
      %767 = vmatprep.subr.mxu0 0.0
      %768 = vmatpush1.msra.mxu0 %v485
      %769 = vmatprep.subr.mxu0 0.0
      %770 = vmatpush1.msra.mxu0 0.0
      %771 = vmatprep.subr.mxu0 0.0
      %772 = vmatpush1.msra.mxu0 0.0
      %773 = vmatprep.subr.mxu0 0.0
      %774 = vmatpush1.msra.mxu0 0.0
      %775 = vmatprep.subr.mxu0 0.0
      %776 = vmatpush1.msra.mxu0 0.0
      %777 = vmatprep.subr.mxu0 0.0
      %778 = vmatpush1.msra.mxu0 0.0
      %779 = vmatprep.subr.mxu0 0.0
      %780 = vmatpush1.msra.mxu0 0.0
      %781 = vmatprep.subr.mxu0 0.0
      %782 = vmatpush1.msra.mxu0 0.0
      %783 = vmatprep.subr.mxu0 0.0
      %784 = vmatpush1.msra.mxu0 0.0
      %785 = vmatprep.subr.mxu0 0.0
      %786 = vmatpush1.msra.mxu0 0.0
      %787 = vmatprep.subr.mxu0 0.0
      %788 = vmatpush1.msra.mxu0 0.0
      %789 = vmatprep.subr.mxu0 0.0
      %790 = vmatpush1.msra.mxu0 0.0
      %791 = vmatprep.subr.mxu0 0.0
      %792 = vmatpush1.msra.mxu0 0.0
      %793 = vmatprep.subr.mxu0 0.0
      %794 = vmatpush1.msra.mxu0 0.0
      %795 = vmatprep.subr.mxu0 0.0
      %796 = vmatpush1.msra.mxu0 0.0
      %797 = vmatprep.subr.mxu0 0.0
      %798 = vmatpush1.msra.mxu0 0.0
      %799 = vmatprep.subr.mxu0 0.0
      %800 = vmatpush1.msra.mxu0 0.0
      %801 = vmatprep.subr.mxu0 0.0
      %802 = vmatpush1.msra.mxu0 0.0
      %803 = vmatprep.subr.mxu0 0.0
      %804 = vmatpush1.msra.mxu0 0.0
      %805 = vmatprep.subr.mxu0 0.0
      %806 = vmatpush1.msra.mxu0 0.0
      %807 = vmatprep.subr.mxu0 0.0
      %808 = vmatpush1.msra.mxu0 0.0
      %809 = vmatprep.subr.mxu0 0.0
      %810 = vmatpush1.msra.mxu0 0.0
      %811 = vmatprep.subr.mxu0 0.0
      %812 = vmatpush1.msra.mxu0 0.0
      %813 = vmatprep.subr.mxu0 0.0
      %814 = vmatpush1.msra.mxu0 0.0
      %815 = vmatprep.subr.mxu0 0.0
      %816 = vmatpush1.msra.mxu0 0.0
      %817 = vmatprep.subr.mxu0 0.0
      %818 = vmatpush1.msra.mxu0 0.0
      %819 = vmatprep.subr.mxu0 0.0
      %820 = vmatpush1.msra.mxu0 0.0
      %821 = vmatprep.subr.mxu0 0.0
      %822 = vmatpush1.msra.mxu0 0.0
      %823 = vmatprep.subr.mxu0 0.0
      %824 = vmatpush1.msra.mxu0 0.0
      %825 = vmatprep.mubr.f32.mxu0 0.0
      %826 = vmatmul.mubr.f32.gmra.mrb[0].mxu0 %v756
      %v827 = vpop.f32.mrb[0].mxu0
      %v828 = vadd.f32 0.0, %v827
      %v829 = vpop.f32.mrb[0].mxu0
      %830 = vmatprep.mubr.f32.mxu0 0.0
      %831 = vmatmul.mubr.f32.gmra.mrb[0].mxu0 %v759
      %v832 = vpop.f32.mrb[0].mxu0
      %v833 = vadd.f32 0.0, %v832
      %v834 = vpop.f32.mrb[0].mxu0
      %835 = vdwg.mxu0
      %v836 = vmul.f32 %v753, %v474
      %v837 = vmul.f32 %v754, %v475
      %v838 = vmul.f32 %v828, %v476
      %v839 = vmul.f32 %v833, %v477
      %v840 = vadd.f32 %v836, %v838
      %v841 = vadd.f32 %v837, %v839
      %842 = vst.msk [vmem:[#allocation22] sm:$0xff] %vm179, %v840
      %843 = vst.msk [vmem:[#allocation22 + $0x8] sm:$0xff] %vm179, %v841
      %s844 = sld [smem:[#allocation5]]
      %v845 = vld [vmem:[#allocation4] sm:$0xff]
      %v846 = vld [vmem:[#allocation4 + $0x8] sm:$0xff]
      %v847 = vstv %s844
      %v848 = vmul.f32 %v847, %v845
      %v849 = vmul.f32 %v847, %v846
      %s850 = sld [smem:[#allocation5 + $0x1]]
      %v851 = vld [vmem:[#allocation15] sm:$0xff]
      %v852 = vld [vmem:[#allocation15 + $0x8] sm:$0xff]
      %v853 = vstv %s850
      %v854 = vmul.f32 %v853, %v851
      %v855 = vmul.f32 %v853, %v852
      %v856 = vadd.f32 %v848, %v854
      %v857 = vadd.f32 %v849, %v855
      %858 = vst.msk [vmem:[#allocation24] sm:$0xff] %vm179, %v856
      %859 = vst.msk [vmem:[#allocation24 + $0x8] sm:$0xff] %vm179, %v857
    $region85: #{tpu_custom_call.1} parent=1 // pred_fallthru
      _
    // Predicated region
    $region86: #{tpu_custom_call.1} parent=1 // pred_check
      _
    $region87: #{tpu_custom_call.1} parent=1 // pred_check_branch
      %861 = sbr.rel (0) target = $region89
    $region88: #{tpu_custom_call.1} parent=1 // pred_region
      %s863 = ssub.s32 256, 256
      %864 = vsyncadd [#allocation7], %s863
      %s865 = sshll.u32 [#allocation21], 4
      %s866 = int_to_ptr.vmem [resolvable:$true] %s865
      %871 = dma.vmem_to_hbm [thread:$0]  %s866, 256, %s10, [#allocation7], 128, 128, 8
    $region89: #{tpu_custom_call.1} parent=1 // pred_fallthru
      _
    // Predicated region
    $region90: #{tpu_custom_call.1} parent=1 // pred_check
      _
    $region91: #{tpu_custom_call.1} parent=1 // pred_check_branch
      %873 = sbr.rel (0) target = $region93
    $region92: #{tpu_custom_call.1} parent=1 // pred_region
      %s875 = ssub.s32 256, 256
      %876 = vsyncadd [#allocation23], %s875
      %s877 = sshll.u32 [#allocation22], 4
      %s878 = int_to_ptr.vmem [resolvable:$true] %s877
      %883 = dma.vmem_to_hbm [thread:$0]  %s878, 256, %s11, [#allocation23], 128, 128, 8
    $region93: #{tpu_custom_call.1} parent=1 // pred_fallthru
      _
    // Predicated region
    $region94: #{tpu_custom_call.1} parent=1 // pred_check
      _
    $region95: #{tpu_custom_call.1} parent=1 // pred_check_branch
      %885 = sbr.rel (0) target = $region97
    $region96: #{tpu_custom_call.1} parent=1 // pred_region
      %s887 = ssub.s32 256, 256
      %888 = vsyncadd [#allocation23], %s887
      %s889 = sshll.u32 [#allocation24], 4
      %s890 = int_to_ptr.vmem [resolvable:$true] %s889
      %895 = dma.vmem_to_hbm [thread:$0]  %s890, 256, %s12, [#allocation23], 128, 128, 8
    $region97: #{tpu_custom_call.1} parent=1 // pred_fallthru
      _
    // Predicated region
    $region98: #{tpu_custom_call.1} parent=1 // pred_check
      _
    $region99: #{tpu_custom_call.1} parent=1 // pred_check_branch
      %897 = sbr.rel (0) target = $region101
    $region100: #{tpu_custom_call.1} parent=1 // pred_region
      %898 = dma.done [#allocation7], 256
    $region101: #{tpu_custom_call.1} parent=1 // pred_fallthru
      _
    // Predicated region
    $region102: #{tpu_custom_call.1} parent=1 // pred_check
      _
    $region103: #{tpu_custom_call.1} parent=1 // pred_check_branch
      %900 = sbr.rel (0) target = $region105
    $region104: #{tpu_custom_call.1} parent=1 // pred_region
      %901 = dma.done [#allocation23], 256
    $region105: #{tpu_custom_call.1} parent=1 // pred_fallthru
      _
    // Predicated region
    $region106: #{tpu_custom_call.1} parent=1 // pred_check
      _
    $region107: #{tpu_custom_call.1} parent=1 // pred_check_branch
      %903 = sbr.rel (0) target = $region109
    $region108: #{tpu_custom_call.1} parent=1 // pred_region
      %904 = dma.done [#allocation23], 256
    $region109: #{tpu_custom_call.1} parent=1 // pred_fallthru
      _
    %905 = vsyncpa [#allocation6], 1
    %906 = vsyncpa [#allocation11], 1
    %907 = vsyncpa [#allocation14], 1
    %908 = vsyncpa [#allocation17], 1
    %909 = vsyncpa [#allocation20], 1
    %910 = vsyncpa [#allocation7], 1
    %911 = vsyncpa [#allocation23], 1
    %912 = vsyncpa [#allocation8], 1

</llo_original>
